<compile_context>
chip_gen: v7x
topology: tpu7x:2x2x1
jax: 0.10.0
libtpu: 0.0.40
codegen_flags: <defaults>
</compile_context>

<pallas_src>
import jax
import jax.numpy as jnp
from jax import lax
from jax.experimental import pallas as pl
from jax.experimental.pallas import tpu as pltpu

HIDDEN = 64
OUT = 2

_TILE_BYTES_TARGET = 2 << 20   # ~2 MiB of x per grid step (amortizes step overhead)
_TB_CAP = 16384                # hard cap on rows per tile


def simplenet_kernel(x_ref, w1_ref, b1_ref, w2t_ref, b2_ref, o_ref):
    # Layer 1: x @ W1 on the MXU with f32 accumulation, bias + ReLU on the VPU.
    h = jnp.dot(x_ref[...], w1_ref[...], preferred_element_type=jnp.float32)
    h = jnp.maximum(h + b1_ref[...], 0.0)                       # (TB, HIDDEN) f32
    # Layer 2, computed transposed so the output's last (lane) dim is TB, not 2:
    #   y_T[o, b] = sum_k w2t[o, k] * h[b, k]
    y_t = lax.dot_general(
        w2t_ref[...], h,
        dimension_numbers=(((1,), (1,)), ((), ())),
        preferred_element_type=jnp.float32,
    )                                                           # (OUT, TB)
    o_ref[...] = (y_t + b2_ref[...]).astype(o_ref.dtype)


def _round_up(x, m):
    return ((x + m - 1) // m) * m


def _choose_batch_tiling(B, D):
    """Pick (TB, n_tiles): TB*n_tiles >= B, TB a multiple of 8 (single tile)
    or 128 (multi-tile, keeps the (OUT, TB) output block lane-dense)."""
    # Largest tile that keeps one f32 x block near the DMA-friendly target size.
    tb_cap = max(128, min(_TB_CAP, (_TILE_BYTES_TARGET // (D * 4)) // 128 * 128))
    if B <= tb_cap:
        # Small/medium batch: single tile, only round rows to the 8-sublane boundary.
        return _round_up(max(B, 1), 8), 1
    # Large batch: >= 2 tiles (feeds both v7x TensorCores), minimal rounding waste.
    n_tiles = pl.cdiv(B, tb_cap)
    tb = _round_up(pl.cdiv(B, n_tiles), 128)
    return tb, pl.cdiv(B, tb)


def simplenet_forward(x, w1, b1, w2, b2):
    """x: (B, D) f32; w1: (D, 64); b1: (64,); w2: (64, 2); b2: (2,). Returns (B, 2) f32."""
    B, D = x.shape
    TB, n_tiles = _choose_batch_tiling(B, D)
    B_pad = TB * n_tiles
    if B_pad != B:
        # Only emitted when B is not already aligned; pad is <= 127 rows per tile.
        x = jnp.pad(x, ((0, B_pad - B), (0, 0)))

    x = x.astype(jnp.float32)
    w1 = w1.astype(jnp.float32)
    b1_2d = b1.reshape(1, HIDDEN).astype(jnp.float32)
    w2t = jnp.transpose(w2).astype(jnp.float32)          # (OUT, HIDDEN)
    b2_col = b2.reshape(OUT, 1).astype(jnp.float32)

    out_t = pl.pallas_call(
        simplenet_kernel,
        out_shape=jax.ShapeDtypeStruct((OUT, B_pad), jnp.float32),
        grid_spec=pltpu.PrefetchScalarGridSpec(
            num_scalar_prefetch=0,
            grid=(n_tiles,),
            in_specs=[
                pl.BlockSpec((TB, D), lambda i: (i, 0)),          # x: streamed per tile
                pl.BlockSpec((D, HIDDEN), lambda i: (0, 0)),      # W1: resident
                pl.BlockSpec((1, HIDDEN), lambda i: (0, 0)),      # b1: resident
                pl.BlockSpec((OUT, HIDDEN), lambda i: (0, 0)),    # W2^T: resident
                pl.BlockSpec((OUT, 1), lambda i: (0, 0)),         # b2: resident
            ],
            out_specs=pl.BlockSpec((OUT, TB), lambda i: (0, i)),  # lane-dense writeback
        ),
        compiler_params=pltpu.CompilerParams(
            dimension_semantics=("parallel",),     # independent batch tiles -> megacore
            vmem_limit_bytes=48 * 1024 * 1024,     # < v7x 64 MiB physical, > default scoped
        ),
    )(x, w1, b1_2d, w2t, b2_col)

    # Back to (B, OUT) row-major in the wrapper.
    return out_t[:, :B].T


def init_params(key, input_dim):
    # Deterministic init mimicking nn.Linear's uniform(-1/sqrt(fan_in), 1/sqrt(fan_in)).
    k1, k2, k3, k4 = jax.random.split(key, 4)
    bound1 = 1.0 / jnp.sqrt(input_dim)
    bound2 = 1.0 / jnp.sqrt(HIDDEN)
    # PyTorch stores weights as (out, in); we keep (in, out) so the kernel does x @ W.
    w1 = jax.random.uniform(k1, (input_dim, HIDDEN), jnp.float32, -bound1, bound1)
    b1 = jax.random.uniform(k2, (HIDDEN,), jnp.float32, -bound1, bound1)
    w2 = jax.random.uniform(k3, (HIDDEN, OUT), jnp.float32, -bound2, bound2)
    b2 = jax.random.uniform(k4, (OUT,), jnp.float32, -bound2, bound2)
    return w1, b1, w2, b2


if __name__ == "__main__":
    key = jax.random.PRNGKey(0)
    key_x, key_p = jax.random.split(key)

    batch, input_dim = 8, 32
    x = jax.random.normal(key_x, (batch, input_dim), jnp.float32)
    w1, b1, w2, b2 = init_params(key_p, input_dim)

    fwd = jax.jit(simplenet_forward)
    out = jax.block_until_ready(fwd(x, w1, b1, w2, b2))

    # Pure-JAX f32 reference (matches the PyTorch module's f32 semantics).
    h_ref = jnp.maximum(jnp.dot(x, w1, precision=lax.Precision.HIGHEST) + b1, 0.0)
    ref = jnp.dot(h_ref, w2, precision=lax.Precision.HIGHEST) + b2

    assert out.shape == (batch, OUT)
    assert jnp.allclose(out, ref, atol=1e-3, rtol=1e-3)

    print("KERNEL_OK")
</pallas_src>

<mosaic_0001>
module attributes {stable_mosaic.version = 11 : i64} {
  func.func @simplenet_kernel(%arg0: i32, %arg1: memref<8x32xf32, #tpu.memory_space<vmem>>, %arg2: memref<32x64xf32, #tpu.memory_space<vmem>>, %arg3: memref<1x64xf32, #tpu.memory_space<vmem>>, %arg4: memref<2x64xf32, #tpu.memory_space<vmem>>, %arg5: memref<2x1xf32, #tpu.memory_space<vmem>>, %arg6: memref<2x8xf32, #tpu.memory_space<vmem>>) attributes {dimension_semantics = [#tpu.dimension_semantics<parallel>], iteration_bounds = array<i64: 1>, scalar_prefetch = 0 : i64, scratch_operands = 0 : i64, tpu.core_type = #tpu.core_type<tc>, window_params = [{transform_indices = @transform_0, window_bounds = array<i64: 8, 32>}, {pipeline_mode = #tpu.pipeline_mode<synchronous>, transform_indices = @transform_1, window_bounds = array<i64: 32, 64>}, {pipeline_mode = #tpu.pipeline_mode<synchronous>, transform_indices = @transform_2, window_bounds = array<i64: 1, 64>}, {pipeline_mode = #tpu.pipeline_mode<synchronous>, transform_indices = @transform_3, window_bounds = array<i64: 2, 64>}, {pipeline_mode = #tpu.pipeline_mode<synchronous>, transform_indices = @transform_4, window_bounds = array<i64: 2, 1>}, {transform_indices = @transform_5, window_bounds = array<i64: 2, 8>}]} {
    %c0 = arith.constant 0 : index
    %c0_0 = arith.constant 0 : index
    %0 = vector.load %arg1[%c0, %c0_0] : memref<8x32xf32, #tpu.memory_space<vmem>>, vector<8x32xf32>
    %c0_1 = arith.constant 0 : index
    %c0_2 = arith.constant 0 : index
    %1 = vector.load %arg2[%c0_1, %c0_2] : memref<32x64xf32, #tpu.memory_space<vmem>>, vector<32x64xf32>
    %cst = arith.constant dense<0.000000e+00> : vector<8x64xf32>
    %2 = tpu.matmul %0, %1, %cst {dimension_numbers = #tpu.dot_dimension_numbers<[1], [0], [0], [1], [0, 0, 1, 1], [], []>} : vector<8x32xf32>, vector<32x64xf32>, vector<8x64xf32> -> vector<8x64xf32>
    %c0_3 = arith.constant 0 : index
    %c0_4 = arith.constant 0 : index
    %3 = vector.load %arg3[%c0_3, %c0_4] : memref<1x64xf32, #tpu.memory_space<vmem>>, vector<1x64xf32>
    %4 = vector.broadcast %3 : vector<1x64xf32> to vector<8x64xf32>
    %5 = arith.addf %2, %4 : vector<8x64xf32>
    %cst_5 = arith.constant 0.000000e+00 : f32
    %6 = vector.broadcast %cst_5 : f32 to vector<8x64xf32>
    %7 = arith.maximumf %5, %6 : vector<8x64xf32>
    %c0_6 = arith.constant 0 : index
    %c0_7 = arith.constant 0 : index
    %8 = vector.load %arg4[%c0_6, %c0_7] : memref<2x64xf32, #tpu.memory_space<vmem>>, vector<2x64xf32>
    %cst_8 = arith.constant dense<0.000000e+00> : vector<2x8xf32>
    %9 = tpu.matmul %8, %7, %cst_8 {dimension_numbers = #tpu.dot_dimension_numbers<[1], [1], [0], [0], [0, 0, 1, 0], [], []>} : vector<2x64xf32>, vector<8x64xf32>, vector<2x8xf32> -> vector<2x8xf32>
    %c0_9 = arith.constant 0 : index
    %c0_10 = arith.constant 0 : index
    %10 = vector.load %arg5[%c0_9, %c0_10] : memref<2x1xf32, #tpu.memory_space<vmem>>, vector<2x1xf32>
    %11 = vector.broadcast %10 : vector<2x1xf32> to vector<2x8xf32>
    %12 = arith.addf %9, %11 : vector<2x8xf32>
    %c0_11 = arith.constant 0 : index
    %c0_12 = arith.constant 0 : index
    %13 = vector.load %arg6[%c0_11, %c0_12] : memref<2x8xf32, #tpu.memory_space<vmem>>, vector<2x8xf32>
    tpu.vector_store %arg6[%c0_11, %c0_12], %12 {strides = array<i32>} : memref<2x8xf32, #tpu.memory_space<vmem>>, vector<2x8xf32>,
    return
  }
  func.func @transform_0(%arg0: i32) -> (i32, i32) {
    %c0_i32 = arith.constant 0 : i32
    %c0_i32_0 = arith.constant 0 : i32
    return %arg0, %c0_i32 : i32, i32
  }
  func.func @transform_1(%arg0: i32) -> (i32, i32) {
    %c0_i32 = arith.constant 0 : i32
    %c0_i32_0 = arith.constant 0 : i32
    %c0_i32_1 = arith.constant 0 : i32
    return %c0_i32, %c0_i32_0 : i32, i32
  }
  func.func @transform_2(%arg0: i32) -> (i32, i32) {
    %c0_i32 = arith.constant 0 : i32
    %c0_i32_0 = arith.constant 0 : i32
    %c0_i32_1 = arith.constant 0 : i32
    return %c0_i32, %c0_i32_0 : i32, i32
  }
  func.func @transform_3(%arg0: i32) -> (i32, i32) {
    %c0_i32 = arith.constant 0 : i32
    %c0_i32_0 = arith.constant 0 : i32
    %c0_i32_1 = arith.constant 0 : i32
    return %c0_i32, %c0_i32_0 : i32, i32
  }
  func.func @transform_4(%arg0: i32) -> (i32, i32) {
    %c0_i32 = arith.constant 0 : i32
    %c0_i32_0 = arith.constant 0 : i32
    %c0_i32_1 = arith.constant 0 : i32
    return %c0_i32, %c0_i32_0 : i32, i32
  }
  func.func @transform_5(%arg0: i32) -> (i32, i32) {
    %c0_i32 = arith.constant 0 : i32
    %c0_i32_0 = arith.constant 0 : i32
    return %c0_i32, %arg0 : i32, i32
  }
}

</mosaic_0001>

<llo_original>
// kernel: simplenet_forward.1
$region0: #{simplenet_forward.1}
  #allocation0 [shape = 'u32[]', space=smem, size = 0x4, offset = 0x4, fixed_abs, tag = 'smem constant byte address 0x4 - core index']
  #allocation1 [shape = 'u32[144,128]{1,0:T(1,128)}', space=vmem, size = 0x12000, scoped, tag = 'internal scratch']
  %s0 = inlined_call_operand.vmem [shape: f32[8,32], index: 0, kind: input, shape index: {}]
  %s1 = inlined_call_operand.hbm [shape: f32[32,64], index: 1, kind: input, shape index: {}]
  %s2 = inlined_call_operand.vmem [shape: f32[1,64], index: 2, kind: input, shape index: {}]
  %s3 = inlined_call_operand.vmem [shape: f32[2,64], index: 3, kind: input, shape index: {}]
  %s4 = inlined_call_operand.vmem [shape: f32[2,1], index: 4, kind: input, shape index: {}]
  %s5 = inlined_call_operand.hbm [shape: f32[2,8], index: 5, kind: output, shape index: {}]
  %s6 = sld [smem:[#allocation0]]
  $region34: #{simplenet_forward.1} parent=0
    _
  %s8 = ssub.s32 1, %s6
  %s9 = scalar_select 0, %s8, %s6
  $region1: #{simplenet_forward.1} parent=0
    #allocation2 [shape = 'u8[16384]{0}', space=vmem, size = 0x4000, scoped, tag = 'input window, operand 1, single buffered']
    #allocation3 [shape = 's32[1]{0}', space=sflag, size = 0x4, scoped, tag = 'scoped memory for simplenet_forward.1']
    #allocation4 [shape = 's32[1]{0}', space=sflag, size = 0x4, scoped, tag = 'scoped memory for simplenet_forward.1']
    #allocation5 [shape = 'u8[1024]{0}', space=vmem, size = 0x400, scoped, tag = 'output window, operand 0, single buffered']
    %10 = vsyncpa [#allocation3], 0
    %11 = vsyncpa [#allocation4], 0
    // Predicated region
    $region2: #{simplenet_forward.1} parent=1 // pred_check
      _
    $region3: #{simplenet_forward.1} parent=1 // pred_check_branch
      %13 = sbr.rel (0) target = $region5
    $region4: #{simplenet_forward.1} parent=1 // pred_region
      _
    $region5: #{simplenet_forward.1} parent=1 // pred_fallthru
      _
    // Predicated region
    $region6: #{simplenet_forward.1} parent=1 // pred_check
      _
    $region7: #{simplenet_forward.1} parent=1 // pred_check_branch
      %15 = sbr.rel (0) target = $region9
    $region8: #{simplenet_forward.1} parent=1 // pred_region
      %s17 = ssub.s32 512, 512
      %18 = vsyncadd [#allocation3], %s17
      %s19 = sshll.u32 [#allocation2], 4
      %s20 = int_to_ptr.vmem [resolvable:$true] %s19
      %25 = dma.hbm_to_vmem [thread:$0]  %s1, 512, %s20, [#allocation3], 128, 128, 8
    $region9: #{simplenet_forward.1} parent=1 // pred_fallthru
      _
    // Predicated region
    $region10: #{simplenet_forward.1} parent=1 // pred_check
      _
    $region11: #{simplenet_forward.1} parent=1 // pred_check_branch
      %27 = sbr.rel (0) target = $region13
    $region12: #{simplenet_forward.1} parent=1 // pred_region
      _
    $region13: #{simplenet_forward.1} parent=1 // pred_fallthru
      _
    // Predicated region
    $region14: #{simplenet_forward.1} parent=1 // pred_check
      _
    $region15: #{simplenet_forward.1} parent=1 // pred_check_branch
      %29 = sbr.rel (0) target = $region17
    $region16: #{simplenet_forward.1} parent=1 // pred_region
      _
    $region17: #{simplenet_forward.1} parent=1 // pred_fallthru
      _
    // Predicated region
    $region18: #{simplenet_forward.1} parent=1 // pred_check
      _
    $region19: #{simplenet_forward.1} parent=1 // pred_check_branch
      %31 = sbr.rel (0) target = $region21
    $region20: #{simplenet_forward.1} parent=1 // pred_region
      _
    $region21: #{simplenet_forward.1} parent=1 // pred_fallthru
      _
    // Predicated region
    $region22: #{simplenet_forward.1} parent=1 // pred_check
      _
    $region23: #{simplenet_forward.1} parent=1 // pred_check_branch
      %33 = sbr.rel (0) target = $region25
    $region24: #{simplenet_forward.1} parent=1 // pred_region
      %34 = dma.done [#allocation3], 512
    $region25: #{simplenet_forward.1} parent=1 // pred_fallthru
      _
    %v35 = vld [vmem:[%s0] sm:$0xff]
    %v36 = vld [vmem:[#allocation2] sm:$0xff]
    %v37 = vld [vmem:[#allocation2 + $0x8] sm:$0xff]
    %v38 = vld [vmem:[#allocation2 + $0x10] sm:$0xff]
    %v39 = vld [vmem:[#allocation2 + $0x18] sm:$0xff]
    %v40 = vld [vmem:[%s2] sm:$0x1]
    %v42 = vlaneseq
    %v43 = vshrl.u32 %v42, 7
    %v44 = vsub.s32 0, %v43
    %v45 = vrot.slane %v40, %v44
    %vm47 = vcmask 261120
    %v49 = vsel %vm47, %v35, 0
    %51 = vmatprep.subr.mxu0 0.0
    %52 = vmatpush1.msra.mxu0 %v36
    %53 = vmatprep.subr.mxu0 0.0
    %54 = vmatpush1.msra.mxu0 %v37
    %55 = vmatprep.subr.mxu0 0.0
    %56 = vmatpush1.msra.mxu0 %v38
    %57 = vmatprep.subr.mxu0 0.0
    %58 = vmatpush1.msra.mxu0 %v39
    %59 = vmatprep.subr.mxu0 0.0
    %60 = vmatpush1.msra.mxu0 0.0
    %61 = vmatprep.subr.mxu0 0.0
    %62 = vmatpush1.msra.mxu0 0.0
    %63 = vmatprep.subr.mxu0 0.0
    %64 = vmatpush1.msra.mxu0 0.0
    %65 = vmatprep.subr.mxu0 0.0
    %66 = vmatpush1.msra.mxu0 0.0
    %67 = vmatprep.subr.mxu0 0.0
    %68 = vmatpush1.msra.mxu0 0.0
    %69 = vmatprep.subr.mxu0 0.0
    %70 = vmatpush1.msra.mxu0 0.0
    %71 = vmatprep.subr.mxu0 0.0
    %72 = vmatpush1.msra.mxu0 0.0
    %73 = vmatprep.subr.mxu0 0.0
    %74 = vmatpush1.msra.mxu0 0.0
    %75 = vmatprep.subr.mxu0 0.0
    %76 = vmatpush1.msra.mxu0 0.0
    %77 = vmatprep.subr.mxu0 0.0
    %78 = vmatpush1.msra.mxu0 0.0
    %79 = vmatprep.subr.mxu0 0.0
    %80 = vmatpush1.msra.mxu0 0.0
    %81 = vmatprep.subr.mxu0 0.0
    %82 = vmatpush1.msra.mxu0 0.0
    %83 = vmatprep.subr.mxu0 0.0
    %84 = vmatpush1.msra.mxu0 0.0
    %85 = vmatprep.subr.mxu0 0.0
    %86 = vmatpush1.msra.mxu0 0.0
    %87 = vmatprep.subr.mxu0 0.0
    %88 = vmatpush1.msra.mxu0 0.0
    %89 = vmatprep.subr.mxu0 0.0
    %90 = vmatpush1.msra.mxu0 0.0
    %91 = vmatprep.subr.mxu0 0.0
    %92 = vmatpush1.msra.mxu0 0.0
    %93 = vmatprep.subr.mxu0 0.0
    %94 = vmatpush1.msra.mxu0 0.0
    %95 = vmatprep.subr.mxu0 0.0
    %96 = vmatpush1.msra.mxu0 0.0
    %97 = vmatprep.subr.mxu0 0.0
    %98 = vmatpush1.msra.mxu0 0.0
    %99 = vmatprep.subr.mxu0 0.0
    %100 = vmatpush1.msra.mxu0 0.0
    %101 = vmatprep.subr.mxu0 0.0
    %102 = vmatpush1.msra.mxu0 0.0
    %103 = vmatprep.subr.mxu0 0.0
    %104 = vmatpush1.msra.mxu0 0.0
    %105 = vmatprep.subr.mxu0 0.0
    %106 = vmatpush1.msra.mxu0 0.0
    %107 = vmatprep.subr.mxu0 0.0
    %108 = vmatpush1.msra.mxu0 0.0
    %109 = vmatprep.subr.mxu0 0.0
    %110 = vmatpush1.msra.mxu0 0.0
    %111 = vmatprep.subr.mxu0 0.0
    %112 = vmatpush1.msra.mxu0 0.0
    %113 = vmatprep.subr.mxu0 0.0
    %114 = vmatpush1.msra.mxu0 0.0
    %115 = vmatprep.mubr.f32.mxu0 0.0
    %116 = vmatmul.mubr.f32.gmra.mrb[0].mxu0 %v49
    %v117 = vpop.f32.mrb[0].mxu0
    %v118 = vadd.f32 %v45, %v117
    %v119 = vpop.f32.mrb[0].mxu0
    %120 = vdwg.mxu0
    %v121 = vmax.f32 %v118, 0.0
    %v122 = vld [vmem:[%s3] sm:$0x3]
    %v123 = vld [vmem:[%s4] sm:$0x3]
    %125 = vset.pattern.permute.xlu0 0
    %126 = vperm.xlu0 %125, %v123
    %v127 = vpop.permute.xlu0 %126
    %vm129 = vcmask 523264
    %v131 = vsel %vm129, %v122, 0
    %v134 = vsel %vm129, %v121, 0
    %136 = vmatprep.subr.mxu0 0.0
    %137 = vmatpush1.xpose.msra.mxu0 %v134
    %138 = vmatprep.subr.mxu0 0.0
    %139 = vmatpush1.xpose.msra.mxu0 0.0
    %140 = vmatprep.subr.mxu0 0.0
    %141 = vmatpush1.xpose.msra.mxu0 0.0
    %142 = vmatprep.subr.mxu0 0.0
    %143 = vmatpush1.xpose.msra.mxu0 0.0
    %144 = vmatprep.subr.mxu0 0.0
    %145 = vmatpush1.xpose.msra.mxu0 0.0
    %146 = vmatprep.subr.mxu0 0.0
    %147 = vmatpush1.xpose.msra.mxu0 0.0
    %148 = vmatprep.subr.mxu0 0.0
    %149 = vmatpush1.xpose.msra.mxu0 0.0
    %150 = vmatprep.subr.mxu0 0.0
    %151 = vmatpush1.xpose.msra.mxu0 0.0
    %152 = vmatprep.subr.mxu0 0.0
    %153 = vmatpush1.xpose.msra.mxu0 0.0
    %154 = vmatprep.subr.mxu0 0.0
    %155 = vmatpush1.xpose.msra.mxu0 0.0
    %156 = vmatprep.subr.mxu0 0.0
    %157 = vmatpush1.xpose.msra.mxu0 0.0
    %158 = vmatprep.subr.mxu0 0.0
    %159 = vmatpush1.xpose.msra.mxu0 0.0
    %160 = vmatprep.subr.mxu0 0.0
    %161 = vmatpush1.xpose.msra.mxu0 0.0
    %162 = vmatprep.subr.mxu0 0.0
    %163 = vmatpush1.xpose.msra.mxu0 0.0
    %164 = vmatprep.subr.mxu0 0.0
    %165 = vmatpush1.xpose.msra.mxu0 0.0
    %166 = vmatprep.subr.mxu0 0.0
    %167 = vmatpush1.xpose.msra.mxu0 0.0
    %168 = vmatprep.subr.mxu0 0.0
    %169 = vmatpush1.xpose.msra.mxu0 0.0
    %170 = vmatprep.subr.mxu0 0.0
    %171 = vmatpush1.xpose.msra.mxu0 0.0
    %172 = vmatprep.subr.mxu0 0.0
    %173 = vmatpush1.xpose.msra.mxu0 0.0
    %174 = vmatprep.subr.mxu0 0.0
    %175 = vmatpush1.xpose.msra.mxu0 0.0
    %176 = vmatprep.subr.mxu0 0.0
    %177 = vmatpush1.xpose.msra.mxu0 0.0
    %178 = vmatprep.subr.mxu0 0.0
    %179 = vmatpush1.xpose.msra.mxu0 0.0
    %180 = vmatprep.subr.mxu0 0.0
    %181 = vmatpush1.xpose.msra.mxu0 0.0
    %182 = vmatprep.subr.mxu0 0.0
    %183 = vmatpush1.xpose.msra.mxu0 0.0
    %184 = vmatprep.subr.mxu0 0.0
    %185 = vmatpush1.xpose.msra.mxu0 0.0
    %186 = vmatprep.subr.mxu0 0.0
    %187 = vmatpush1.xpose.msra.mxu0 0.0
    %188 = vmatprep.subr.mxu0 0.0
    %189 = vmatpush1.xpose.msra.mxu0 0.0
    %190 = vmatprep.subr.mxu0 0.0
    %191 = vmatpush1.xpose.msra.mxu0 0.0
    %192 = vmatprep.subr.mxu0 0.0
    %193 = vmatpush1.xpose.msra.mxu0 0.0
    %194 = vmatprep.subr.mxu0 0.0
    %195 = vmatpush1.xpose.msra.mxu0 0.0
    %196 = vmatprep.subr.mxu0 0.0
    %197 = vmatpush1.xpose.msra.mxu0 0.0
    %198 = vmatprep.subr.mxu0 0.0
    %199 = vmatpush1.xpose.msra.mxu0 0.0
    %200 = vmatprep.mubr.f32.mxu0 0.0
    %201 = vmatmul.mubr.f32.gmra.mrb[0].mxu0 %v131
    %v202 = vpop.f32.mrb[0].mxu0
    %v203 = vadd.f32 %v127, %v202
    %v204 = vpop.f32.mrb[0].mxu0
    %205 = vdwg.mxu0
    %vm206 = vcmask 58368
    %207 = vst.msk [vmem:[#allocation5] sm:$0x3] %vm206, %v203
    // Predicated region
    $region26: #{simplenet_forward.1} parent=1 // pred_check
      _
    $region27: #{simplenet_forward.1} parent=1 // pred_check_branch
      %209 = sbr.rel (0) target = $region29
    $region28: #{simplenet_forward.1} parent=1 // pred_region
      %s211 = ssub.s32 32, 32
      %212 = vsyncadd [#allocation4], %s211
      %s214 = sshll.u32 [#allocation5], 4
      %s215 = int_to_ptr.vmem [resolvable:$true] %s214
      %217 = dma.vmem_to_hbm [thread:$0]  %s215, 32, %s5, [#allocation4]
    $region29: #{simplenet_forward.1} parent=1 // pred_fallthru
      _
    // Predicated region
    $region30: #{simplenet_forward.1} parent=1 // pred_check
      _
    $region31: #{simplenet_forward.1} parent=1 // pred_check_branch
      %219 = sbr.rel (0) target = $region33
    $region32: #{simplenet_forward.1} parent=1 // pred_region
      %220 = dma.done [#allocation4], 32
    $region33: #{simplenet_forward.1} parent=1 // pred_fallthru
      _
    %221 = vsyncpa [#allocation3], 1
    %222 = vsyncpa [#allocation4], 1

</llo_original>
